<compile_context>
chip_gen: v6e
topology: v6e:2x2x1
jax: 0.10.0
libtpu: 0.0.40
codegen_flags: <defaults>
</compile_context>

<pallas_src>
import jax
import jax.numpy as jnp
from jax import lax
from jax.experimental import pallas as pl
from jax.experimental.pallas import tpu as pltpu


HIDDEN = 32


# ----------------------------------------------------------------------------
# Kernels
# ----------------------------------------------------------------------------
def adversarial_kernel(x_ref, w1_ref, b1_ref, w2t_ref, b2_ref, o_ref):
    # x: [TILE_B, D]   w1: [D, 32]   b1: [1, 32]   w2t: [1, 32]
    # b2: [1, 1] scalar in SMEM      o: [1, TILE_B] (lane-dense output slab)
    x = x_ref[...]

    # Linear 1 + ReLU (MXU matmul, f32 accumulate; bias/ReLU on VPU).
    h = jnp.dot(x, w1_ref[...], preferred_element_type=jnp.float32)
    h = jnp.maximum(h + b1_ref[...], 0.0)                     # [TILE_B, 32] f32

    # Linear 2, computed transposed so the result is lane-dense:
    #   o[0, b] = sum_k w2t[0, k] * h[b, k]   ->   [1, TILE_B]
    o = lax.dot_general(
        w2t_ref[...].astype(jnp.float32), h,
        dimension_numbers=(((1,), (1,)), ((), ())),
        preferred_element_type=jnp.float32,
    )
    o_ref[...] = (o + b2_ref[0, 0]).astype(o_ref.dtype)


def _make_ktiled_kernel(d_total, tile_k):
    """K-tiled variant for very large D: accumulate x@w1 over D tiles."""
    d_ragged = (d_total % tile_k) != 0

    def kernel(x_ref, w1_ref, b1_ref, w2t_ref, b2_ref, o_ref, acc_ref):
        k = pl.program_id(1)

        @pl.when(k == 0)
        def _():
            acc_ref[...] = jnp.zeros_like(acc_ref)

        x = x_ref[...]
        if d_ragged:
            # Zero columns past D (partial last K block would otherwise feed
            # garbage into valid rows' accumulation). w1 is zero-padded on the
            # host side, so masked-x * padded-w1 contributes exact zeros.
            col = lax.broadcasted_iota(jnp.int32, x.shape, 1) + k * tile_k
            x = jnp.where(col < d_total, x, jnp.zeros_like(x))

        acc_ref[...] += jnp.dot(x, w1_ref[...], preferred_element_type=jnp.float32)

        @pl.when(k == pl.num_programs(1) - 1)
        def _():
            h = jnp.maximum(acc_ref[...] + b1_ref[...], 0.0)
            o = lax.dot_general(
                w2t_ref[...].astype(jnp.float32), h,
                dimension_numbers=(((1,), (1,)), ((), ())),
                preferred_element_type=jnp.float32,
            )
            o_ref[...] = (o + b2_ref[0, 0]).astype(o_ref.dtype)

    return kernel


# ----------------------------------------------------------------------------
# Tiling / sizing helpers
# ----------------------------------------------------------------------------
def _vmem_limit_and_budget():
    """(scoped vmem limit, working-set budget) per chip generation."""
    try:
        info = pltpu.get_tpu_info()
        cap = getattr(info, "vmem_capacity_bytes", None)
    except Exception:
        cap = None
    if cap is not None and cap >= 128 * 1024 * 1024:     # v5e / v6e
        return 64 * 1024 * 1024, 48 * 1024 * 1024
    return 32 * 1024 * 1024, 20 * 1024 * 1024            # v7x or unknown


def _pick_tile_b(batch, d, x_isz, budget):
    """Largest batch tile (multiple of 128) whose VMEM working set fits budget.

    Per-row cost: 2 x-buffers (2*d*isz) + lane-padded f32 h temporaries and
    output buffers (~1.2 KiB). Fixed cost: double-buffered, lane-padded (128
    wide) resident w1 plus slack.
    """
    per_row = 2 * d * x_isz + 1152
    fixed = 2 * d * 128 * x_isz + 128 * 1024
    avail = budget - fixed
    tile = avail // per_row if avail > 0 else 0
    tile = max(128, min(32768, (tile // 128) * 128))
    b_ceil = pl.cdiv(batch, 128) * 128
    tile = min(tile, b_ceil)
    # Give the second v7x TensorCore a grid step when the batch allows it
    # (negligible per-step cost on single-TC chips).
    if b_ceil >= 256 and pl.cdiv(batch, tile) == 1:
        tile = pl.cdiv(pl.cdiv(batch, 2), 128) * 128
    return tile


# ----------------------------------------------------------------------------
# Forward wrapper
# ----------------------------------------------------------------------------
def adversarial_forward(x, w1, b1, w2, b2, *, tile_b=None, tile_k=None,
                        force_k_tiling=False):
    """Forward pass of Linear(D,32) -> ReLU -> Linear(32,1). Returns [B, 1]."""
    B, D = x.shape
    H = w1.shape[1]
    assert w1.shape == (D, H) and b1.shape == (1, H)
    assert w2.shape == (H, 1) and b2.shape == (1, 1)

    out_dtype = x.dtype
    x_isz = jnp.dtype(x.dtype).itemsize

    # Stream x in its native dtype; only cast the tiny resident weight.
    if w1.dtype != x.dtype:
        w1 = w1.astype(x.dtype)
    w2t = w2.T.astype(jnp.float32)                     # [1, H]
    b1 = b1.astype(jnp.float32)
    b2 = b2.astype(jnp.float32)

    vmem_limit, budget = _vmem_limit_and_budget()
    cost = pl.CostEstimate(
        flops=2 * B * H * (D + 1),
        transcendentals=0,
        bytes_accessed=B * D * x_isz + D * H * x_isz
        + B * jnp.dtype(out_dtype).itemsize,
    )

    # Would even a minimum (128, D) x block (+ resident, lane-padded w1) blow
    # the budget?  If so, use the K-tiled path.
    needs_k = (2 * 128 * D * x_isz + 2 * D * 128 * x_isz) > budget

    if not (needs_k or force_k_tiling):
        if tile_b is None:
            tile_b = _pick_tile_b(B, D, x_isz, budget)
        tile_b = max(128, pl.cdiv(tile_b, 128) * 128)
        grid = (pl.cdiv(B, tile_b),)                   # ragged B: partial last block

        out = pl.pallas_call(
            adversarial_kernel,
            out_shape=jax.ShapeDtypeStruct((1, B), out_dtype),
            grid=grid,
            in_specs=[
                pl.BlockSpec((tile_b, D), lambda i: (i, 0)),          # streamed x
                pl.BlockSpec((D, H), lambda i: (0, 0)),               # resident w1
                pl.BlockSpec((1, H), lambda i: (0, 0)),               # resident b1
                pl.BlockSpec((1, H), lambda i: (0, 0)),               # resident w2^T
                pl.BlockSpec(memory_space=pltpu.MemorySpace.SMEM),    # scalar b2
            ],
            out_specs=pl.BlockSpec((1, tile_b), lambda i: (0, i)),    # lane-dense out
            compiler_params=pltpu.CompilerParams(
                dimension_semantics=("parallel",),
                vmem_limit_bytes=vmem_limit,
            ),
            cost_estimate=cost,
        )(x, w1, b1, w2t, b2)
        return out[0, :B].reshape(B, 1)

    # ---------------- K-tiled path (very large D) ----------------
    if tile_b is None:
        tile_b = min(512, pl.cdiv(B, 128) * 128)
    tile_b = max(128, pl.cdiv(tile_b, 128) * 128)
    if tile_k is None:
        per_col = 2 * (tile_b + 128) * x_isz           # x db + lane-padded w1 db
        tile_k = (budget - (1 << 20)) // per_col
    tile_k = max(128, (int(tile_k) // 128) * 128)
    tile_k = min(tile_k, pl.cdiv(D, 128) * 128)

    dk = pl.cdiv(D, tile_k) * tile_k
    w1p = w1 if dk == D else jnp.pad(w1, ((0, dk - D), (0, 0)))  # tiny, resident-ish
    grid = (pl.cdiv(B, tile_b), pl.cdiv(D, tile_k))

    out = pl.pallas_call(
        _make_ktiled_kernel(D, tile_k),
        out_shape=jax.ShapeDtypeStruct((1, B), out_dtype),
        grid=grid,
        in_specs=[
            pl.BlockSpec((tile_b, tile_k), lambda i, k: (i, k)),      # x tiles
            pl.BlockSpec((tile_k, H), lambda i, k: (k, 0)),           # w1 K-tiles
            pl.BlockSpec((1, H), lambda i, k: (0, 0)),                # b1
            pl.BlockSpec((1, H), lambda i, k: (0, 0)),                # w2^T
            pl.BlockSpec(memory_space=pltpu.MemorySpace.SMEM),        # b2
        ],
        out_specs=pl.BlockSpec((1, tile_b), lambda i, k: (0, i)),
        scratch_shapes=[pltpu.VMEM((tile_b, H), jnp.float32)],        # accumulator
        compiler_params=pltpu.CompilerParams(
            dimension_semantics=("parallel", "arbitrary"),
            vmem_limit_bytes=vmem_limit,
        ),
        cost_estimate=cost,
    )(x, w1p, b1, w2t, b2)
    return out[0, :B].reshape(B, 1)


# ----------------------------------------------------------------------------
# Params / reference
# ----------------------------------------------------------------------------
def init_params(key, input_dim, hidden=HIDDEN):
    # torch.nn.Linear default init: U(-1/sqrt(fan_in), 1/sqrt(fan_in)).
    k1, k2, k3, k4 = jax.random.split(key, 4)
    bound1 = 1.0 / jnp.sqrt(input_dim)
    bound2 = 1.0 / jnp.sqrt(hidden)
    w1 = jax.random.uniform(k1, (input_dim, hidden), jnp.float32, -bound1, bound1)
    b1 = jax.random.uniform(k2, (1, hidden), jnp.float32, -bound1, bound1)
    w2 = jax.random.uniform(k3, (hidden, 1), jnp.float32, -bound2, bound2)
    b2 = jax.random.uniform(k4, (1, 1), jnp.float32, -bound2, bound2)
    return w1, b1, w2, b2


def _reference(x, w1, b1, w2, b2):
    return jnp.maximum(x @ w1 + b1, 0.0) @ w2 + b2


if __name__ == "__main__":
    key = jax.random.PRNGKey(0)
    k_x1, k_x2, k_p = jax.random.split(key, 3)

    # Small case (matches the module's typical usage).
    batch, input_dim = 8, 32
    x = jax.random.normal(k_x1, (batch, input_dim), jnp.float32)
    w1, b1, w2, b2 = init_params(k_p, input_dim)

    out = jax.block_until_ready(adversarial_forward(x, w1, b1, w2, b2))
    assert out.shape == (batch, 1)
    assert jnp.allclose(out, _reference(x, w1, b1, w2, b2), atol=1e-5, rtol=1e-5)

    # Ragged batch, multi-step grid, partial last block -- no wrapper padding.
    batch2 = 200
    x2 = jax.random.normal(k_x2, (batch2, input_dim), jnp.float32)
    out2 = jax.block_until_ready(
        adversarial_forward(x2, w1, b1, w2, b2, tile_b=128))
    assert out2.shape == (batch2, 1)
    assert jnp.allclose(out2, _reference(x2, w1, b1, w2, b2), atol=1e-5, rtol=1e-5)

    # Native-bf16 activations: x streamed at 2 B/elem, f32 accumulation.
    x2_bf16 = x2.astype(jnp.bfloat16)
    out3 = jax.block_until_ready(adversarial_forward(x2_bf16, w1, b1, w2, b2))
    ref3 = _reference(x2_bf16.astype(jnp.float32),
                      w1.astype(jnp.bfloat16).astype(jnp.float32), b1, w2, b2)
    assert out3.shape == (batch2, 1)
    assert jnp.allclose(out3.astype(jnp.float32), ref3, atol=2e-2, rtol=2e-2)

    # K-tiled fallback (normally only for very large D) exercised at small D,
    # including a ragged D (160 % 128 != 0) to cover the masking path.
    input_dim2 = 160
    x3 = jax.random.normal(k_x1, (batch2, input_dim2), jnp.float32)
    w1b, b1b, w2b, b2b = init_params(k_p, input_dim2)
    out4 = jax.block_until_ready(
        adversarial_forward(x3, w1b, b1b, w2b, b2b,
                            force_k_tiling=True, tile_b=128, tile_k=128))
    assert out4.shape == (batch2, 1)
    assert jnp.allclose(out4, _reference(x3, w1b, b1b, w2b, b2b),
                        atol=1e-4, rtol=1e-4)

    print("KERNEL_OK")
</pallas_src>

<mosaic_0001>
module attributes {stable_mosaic.version = 11 : i64} {
  func.func @adversarial_kernel(%arg0: i32, %arg1: memref<128x32xf32, #tpu.memory_space<vmem>>, %arg2: memref<32x32xf32, #tpu.memory_space<vmem>>, %arg3: memref<1x32xf32, #tpu.memory_space<vmem>>, %arg4: memref<1x32xf32, #tpu.memory_space<vmem>>, %arg5: memref<1x1xf32, #tpu.memory_space<smem>>, %arg6: memref<1x128xf32, #tpu.memory_space<vmem>>) attributes {dimension_semantics = [#tpu.dimension_semantics<parallel>], iteration_bounds = array<i64: 1>, scalar_prefetch = 0 : i64, scratch_operands = 0 : i64, tpu.core_type = #tpu.core_type<tc>, window_params = [{transform_indices = @transform_0, window_bounds = array<i64: 128, 32>}, {pipeline_mode = #tpu.pipeline_mode<synchronous>, transform_indices = @transform_1, window_bounds = array<i64: 32, 32>}, {pipeline_mode = #tpu.pipeline_mode<synchronous>, transform_indices = @transform_2, window_bounds = array<i64: 1, 32>}, {pipeline_mode = #tpu.pipeline_mode<synchronous>, transform_indices = @transform_3, window_bounds = array<i64: 1, 32>}, {transform_indices = @transform_4, window_bounds = array<i64: 1, 1>}, {transform_indices = @transform_5, window_bounds = array<i64: 1, 128>}]} {
    %c0 = arith.constant 0 : index
    %c0_0 = arith.constant 0 : index
    %0 = vector.load %arg1[%c0, %c0_0] : memref<128x32xf32, #tpu.memory_space<vmem>>, vector<128x32xf32>
    %c0_1 = arith.constant 0 : index
    %c0_2 = arith.constant 0 : index
    %1 = vector.load %arg2[%c0_1, %c0_2] : memref<32x32xf32, #tpu.memory_space<vmem>>, vector<32x32xf32>
    %cst = arith.constant dense<0.000000e+00> : vector<128x32xf32>
    %2 = tpu.matmul %0, %1, %cst {dimension_numbers = #tpu.dot_dimension_numbers<[1], [0], [0], [1], [0, 0, 1, 1], [], []>} : vector<128x32xf32>, vector<32x32xf32>, vector<128x32xf32> -> vector<128x32xf32>
    %c0_3 = arith.constant 0 : index
    %c0_4 = arith.constant 0 : index
    %3 = vector.load %arg3[%c0_3, %c0_4] : memref<1x32xf32, #tpu.memory_space<vmem>>, vector<1x32xf32>
    %4 = vector.broadcast %3 : vector<1x32xf32> to vector<128x32xf32>
    %5 = arith.addf %2, %4 : vector<128x32xf32>
    %cst_5 = arith.constant 0.000000e+00 : f32
    %6 = vector.broadcast %cst_5 : f32 to vector<128x32xf32>
    %7 = arith.maximumf %5, %6 : vector<128x32xf32>
    %c0_6 = arith.constant 0 : index
    %c0_7 = arith.constant 0 : index
    %8 = vector.load %arg4[%c0_6, %c0_7] : memref<1x32xf32, #tpu.memory_space<vmem>>, vector<1x32xf32>
    %cst_8 = arith.constant dense<0.000000e+00> : vector<1x128xf32>
    %9 = tpu.matmul %8, %7, %cst_8 {dimension_numbers = #tpu.dot_dimension_numbers<[1], [1], [0], [0], [0, 0, 1, 0], [], []>} : vector<1x32xf32>, vector<128x32xf32>, vector<1x128xf32> -> vector<1x128xf32>
    %c0_9 = arith.constant 0 : index
    %c0_10 = arith.constant 0 : index
    %10 = memref.load %arg5[%c0_9, %c0_10] : memref<1x1xf32, #tpu.memory_space<smem>>
    %11 = vector.broadcast %10 : f32 to vector<1x128xf32>
    %12 = arith.addf %9, %11 : vector<1x128xf32>
    %c0_11 = arith.constant 0 : index
    %c0_12 = arith.constant 0 : index
    %13 = vector.load %arg6[%c0_11, %c0_12] : memref<1x128xf32, #tpu.memory_space<vmem>>, vector<1x128xf32>
    tpu.vector_store %arg6[%c0_11, %c0_12], %12 {strides = array<i32>} : memref<1x128xf32, #tpu.memory_space<vmem>>, vector<1x128xf32>,
    return
  }
  func.func @transform_0(%arg0: i32) -> (i32, i32) {
    %c0_i32 = arith.constant 0 : i32
    %c0_i32_0 = arith.constant 0 : i32
    return %arg0, %c0_i32 : i32, i32
  }
  func.func @transform_1(%arg0: i32) -> (i32, i32) {
    %c0_i32 = arith.constant 0 : i32
    %c0_i32_0 = arith.constant 0 : i32
    %c0_i32_1 = arith.constant 0 : i32
    return %c0_i32, %c0_i32_0 : i32, i32
  }
  func.func @transform_2(%arg0: i32) -> (i32, i32) {
    %c0_i32 = arith.constant 0 : i32
    %c0_i32_0 = arith.constant 0 : i32
    %c0_i32_1 = arith.constant 0 : i32
    return %c0_i32, %c0_i32_0 : i32, i32
  }
  func.func @transform_3(%arg0: i32) -> (i32, i32) {
    %c0_i32 = arith.constant 0 : i32
    %c0_i32_0 = arith.constant 0 : i32
    %c0_i32_1 = arith.constant 0 : i32
    return %c0_i32, %c0_i32_0 : i32, i32
  }
  func.func @transform_4(%arg0: i32) -> (i32, i32) {
    %c0_i32 = arith.constant 0 : i32
    %c0_i32_0 = arith.constant 0 : i32
    %c0_i32_1 = arith.constant 0 : i32
    return %c0_i32, %c0_i32_0 : i32, i32
  }
  func.func @transform_5(%arg0: i32) -> (i32, i32) {
    %c0_i32 = arith.constant 0 : i32
    %c0_i32_0 = arith.constant 0 : i32
    return %c0_i32, %arg0 : i32, i32
  }
}

</mosaic_0001>

<llo_original>
// kernel: tpu_custom_call.1
$region0: #{tpu_custom_call.1}
  #allocation0 [shape = 'u32[]', space=smem, size = 0x4, offset = 0x4, fixed_abs, tag = 'smem constant byte address 0x4 - core index']
  #allocation1 [shape = 'u32[144,128]{1,0:T(1,128)}', space=vmem, size = 0x12000, scoped, tag = 'internal scratch']
  #allocation2 [shape = 'f32[1,1]{1,0:T(1,128)S(6)}', space=smem, size = 0x200, scoped, tag = 'scoped memory for tpu_custom_call.1']
  %s0 = inlined_call_operand.hbm [shape: f32[8,32], index: 0, kind: input, shape index: {}]
  %s1 = inlined_call_operand.hbm [shape: f32[32,32], index: 1, kind: input, shape index: {}]
  %s2 = inlined_call_operand.vmem [shape: f32[1,32], index: 2, kind: input, shape index: {}]
  %s3 = inlined_call_operand.vmem [shape: f32[1,32], index: 3, kind: input, shape index: {}]
  %s4 = inlined_call_operand.<no memory space> [shape: f32[1,1], index: 4, kind: input, shape index: {}]
  %s5 = inlined_call_operand.hbm [shape: f32[1,8], index: 5, kind: output, shape index: {}]
  %s6 = sld [smem:[#allocation0]]
  $region38: #{tpu_custom_call.1} parent=0
    _
  %s8 = ssub.s32 1, %s6
  %s9 = scalar_select 0, %s8, %s6
  %10 = sst [smem:[#allocation2]] %s4
  $region1: #{tpu_custom_call.1} parent=0
    #allocation3 [shape = 'u8[65536]{0}', space=vmem, size = 0x10000, scoped, tag = 'input window, operand 0, single buffered']
    #allocation4 [shape = 's32[1]{0}', space=sflag, size = 0x4, scoped, tag = 'scoped memory for tpu_custom_call.1']
    #allocation5 [shape = 's32[1]{0}', space=sflag, size = 0x4, scoped, tag = 'scoped memory for tpu_custom_call.1']
    #allocation6 [shape = 'u8[16384]{0}', space=vmem, size = 0x4000, scoped, tag = 'input window, operand 1, single buffered']
    #allocation7 [shape = 's32[1]{0}', space=sflag, size = 0x4, scoped, tag = 'scoped memory for tpu_custom_call.1']
    #allocation8 [shape = 'u8[512]{0}', space=vmem, size = 0x400, scoped, tag = 'output window, operand 0, single buffered']
    %11 = vsyncpa [#allocation4], 0
    %12 = vsyncpa [#allocation7], 0
    %13 = vsyncpa [#allocation5], 0
    // Predicated region
    $region2: #{tpu_custom_call.1} parent=1 // pred_check
      _
    $region3: #{tpu_custom_call.1} parent=1 // pred_check_branch
      %15 = sbr.rel (0) target = $region5
    $region4: #{tpu_custom_call.1} parent=1 // pred_region
      %s17 = ssub.s32 2048, 128
      %18 = vsyncadd [#allocation4], %s17
      %s19 = sshll.u32 [#allocation3], 4
      %s20 = int_to_ptr.vmem [resolvable:$true] %s19
      %25 = dma.hbm_to_vmem [thread:$0]  %s0, 128, %s20, [#allocation4], 128, 128, 8
    $region5: #{tpu_custom_call.1} parent=1 // pred_fallthru
      _
    // Predicated region
    $region6: #{tpu_custom_call.1} parent=1 // pred_check
      _
    $region7: #{tpu_custom_call.1} parent=1 // pred_check_branch
      %27 = sbr.rel (0) target = $region9
    $region8: #{tpu_custom_call.1} parent=1 // pred_region
      %s29 = ssub.s32 512, 512
      %30 = vsyncadd [#allocation7], %s29
      %s31 = sshll.u32 [#allocation6], 4
      %s32 = int_to_ptr.vmem [resolvable:$true] %s31
      %37 = dma.hbm_to_vmem [thread:$0]  %s1, 512, %s32, [#allocation7], 128, 128, 8
    $region9: #{tpu_custom_call.1} parent=1 // pred_fallthru
      _
    // Predicated region
    $region10: #{tpu_custom_call.1} parent=1 // pred_check
      _
    $region11: #{tpu_custom_call.1} parent=1 // pred_check_branch
      %39 = sbr.rel (0) target = $region13
    $region12: #{tpu_custom_call.1} parent=1 // pred_region
      _
    $region13: #{tpu_custom_call.1} parent=1 // pred_fallthru
      _
    // Predicated region
    $region14: #{tpu_custom_call.1} parent=1 // pred_check
      _
    $region15: #{tpu_custom_call.1} parent=1 // pred_check_branch
      %41 = sbr.rel (0) target = $region17
    $region16: #{tpu_custom_call.1} parent=1 // pred_region
      _
    $region17: #{tpu_custom_call.1} parent=1 // pred_fallthru
      _
    // Predicated region
    $region18: #{tpu_custom_call.1} parent=1 // pred_check
      _
    $region19: #{tpu_custom_call.1} parent=1 // pred_check_branch
      %43 = sbr.rel (0) target = $region21
    $region20: #{tpu_custom_call.1} parent=1 // pred_region
      _
    $region21: #{tpu_custom_call.1} parent=1 // pred_fallthru
      _
    // Predicated region
    $region22: #{tpu_custom_call.1} parent=1 // pred_check
      _
    $region23: #{tpu_custom_call.1} parent=1 // pred_check_branch
      %45 = sbr.rel (0) target = $region25
    $region24: #{tpu_custom_call.1} parent=1 // pred_region
      %46 = dma.done [#allocation4], 2048
    $region25: #{tpu_custom_call.1} parent=1 // pred_fallthru
      _
    // Predicated region
    $region26: #{tpu_custom_call.1} parent=1 // pred_check
      _
    $region27: #{tpu_custom_call.1} parent=1 // pred_check_branch
      %48 = sbr.rel (0) target = $region29
    $region28: #{tpu_custom_call.1} parent=1 // pred_region
      %49 = dma.done [#allocation7], 512
    $region29: #{tpu_custom_call.1} parent=1 // pred_fallthru
      _
    %v50 = vld [vmem:[#allocation3] sm:$0xff]
    %v51 = vld [vmem:[#allocation3 + $0x8] sm:$0xff]
    %v52 = vld [vmem:[#allocation3 + $0x10] sm:$0xff]
    %v53 = vld [vmem:[#allocation3 + $0x18] sm:$0xff]
    %v54 = vld [vmem:[#allocation3 + $0x20] sm:$0xff]
    %v55 = vld [vmem:[#allocation3 + $0x28] sm:$0xff]
    %v56 = vld [vmem:[#allocation3 + $0x30] sm:$0xff]
    %v57 = vld [vmem:[#allocation3 + $0x38] sm:$0xff]
    %v58 = vld [vmem:[#allocation3 + $0x40] sm:$0xff]
    %v59 = vld [vmem:[#allocation3 + $0x48] sm:$0xff]
    %v60 = vld [vmem:[#allocation3 + $0x50] sm:$0xff]
    %v61 = vld [vmem:[#allocation3 + $0x58] sm:$0xff]
    %v62 = vld [vmem:[#allocation3 + $0x60] sm:$0xff]
    %v63 = vld [vmem:[#allocation3 + $0x68] sm:$0xff]
    %v64 = vld [vmem:[#allocation3 + $0x70] sm:$0xff]
    %v65 = vld [vmem:[#allocation3 + $0x78] sm:$0xff]
    %v66 = vld [vmem:[#allocation6] sm:$0xff]
    %v67 = vld [vmem:[#allocation6 + $0x8] sm:$0xff]
    %v68 = vld [vmem:[#allocation6 + $0x10] sm:$0xff]
    %v69 = vld [vmem:[#allocation6 + $0x18] sm:$0xff]
    %v70 = vld [vmem:[%s2] sm:$0x1]
    %v72 = vlaneseq
    %v73 = vshrl.u32 %v72, 7
    %v74 = vsub.s32 0, %v73
    %v75 = vrot.slane %v70, %v74
    %vm77 = vcmask 261120
    %v79 = vsel %vm77, %v50, 0
    %v82 = vsel %vm77, %v51, 0
    %v85 = vsel %vm77, %v52, 0
    %v88 = vsel %vm77, %v53, 0
    %v91 = vsel %vm77, %v54, 0
    %v94 = vsel %vm77, %v55, 0
    %v97 = vsel %vm77, %v56, 0
    %v100 = vsel %vm77, %v57, 0
    %v103 = vsel %vm77, %v58, 0
    %v106 = vsel %vm77, %v59, 0
    %v109 = vsel %vm77, %v60, 0
    %v112 = vsel %vm77, %v61, 0
    %v115 = vsel %vm77, %v62, 0
    %v118 = vsel %vm77, %v63, 0
    %v121 = vsel %vm77, %v64, 0
    %v124 = vsel %vm77, %v65, 0
    %126 = vmatprep.subr.mxu0 0.0
    %127 = vmatpush1.msra.mxu0 0.0
    %128 = vmatprep.subr.mxu0 0.0
    %129 = vmatpush1.msra.mxu0 0.0
    %130 = vmatprep.subr.mxu0 0.0
    %131 = vmatpush1.msra.mxu0 0.0
    %132 = vmatprep.subr.mxu0 0.0
    %133 = vmatpush1.msra.mxu0 0.0
    %134 = vmatprep.subr.mxu0 0.0
    %135 = vmatpush1.msra.mxu0 0.0
    %136 = vmatprep.subr.mxu0 0.0
    %137 = vmatpush1.msra.mxu0 0.0
    %138 = vmatprep.subr.mxu0 0.0
    %139 = vmatpush1.msra.mxu0 0.0
    %140 = vmatprep.subr.mxu0 0.0
    %141 = vmatpush1.msra.mxu0 0.0
    %142 = vmatprep.subr.mxu0 0.0
    %143 = vmatpush1.msra.mxu0 0.0
    %144 = vmatprep.subr.mxu0 0.0
    %145 = vmatpush1.msra.mxu0 0.0
    %146 = vmatprep.subr.mxu0 0.0
    %147 = vmatpush1.msra.mxu0 0.0
    %148 = vmatprep.subr.mxu0 0.0
    %149 = vmatpush1.msra.mxu0 0.0
    %150 = vmatprep.subr.mxu0 0.0
    %151 = vmatpush1.msra.mxu0 %v69
    %152 = vmatprep.subr.mxu0 0.0
    %153 = vmatpush1.msra.mxu0 %v68
    %154 = vmatprep.subr.mxu0 0.0
    %155 = vmatpush1.msra.mxu0 %v67
    %156 = vmatprep.subr.mxu0 0.0
    %157 = vmatpush1.msra.mxu0 %v66
    %158 = vmatprep.subr.mxu0 0.0
    %159 = vmatpush2.msra.mxu0 0.0
    %160 = vmatprep.subr.mxu0 0.0
    %161 = vmatpush2.msra.mxu0 0.0
    %162 = vmatprep.subr.mxu0 0.0
    %163 = vmatpush2.msra.mxu0 0.0
    %164 = vmatprep.subr.mxu0 0.0
    %165 = vmatpush2.msra.mxu0 0.0
    %166 = vmatprep.subr.mxu0 0.0
    %167 = vmatpush2.msra.mxu0 0.0
    %168 = vmatprep.subr.mxu0 0.0
    %169 = vmatpush2.msra.mxu0 0.0
    %170 = vmatprep.subr.mxu0 0.0
    %171 = vmatpush2.msra.mxu0 0.0
    %172 = vmatprep.subr.mxu0 0.0
    %173 = vmatpush2.msra.mxu0 0.0
    %174 = vmatprep.subr.mxu0 0.0
    %175 = vmatpush2.msra.mxu0 0.0
    %176 = vmatprep.subr.mxu0 0.0
    %177 = vmatpush2.msra.mxu0 0.0
    %178 = vmatprep.subr.mxu0 0.0
    %179 = vmatpush2.msra.mxu0 0.0
    %180 = vmatprep.subr.mxu0 0.0
    %181 = vmatpush2.msra.mxu0 0.0
    %182 = vmatprep.subr.mxu0 0.0
    %183 = vmatpush2.msra.mxu0 0.0
    %184 = vmatprep.subr.mxu0 0.0
    %185 = vmatpush2.msra.mxu0 0.0
    %186 = vmatprep.subr.mxu0 0.0
    %187 = vmatpush2.msra.mxu0 0.0
    %188 = vmatprep.subr.mxu0 0.0
    %189 = vmatpush2.msra.mxu0 0.0
    %190 = vmatprep.mubr.f32.mxu0 0.0
    %191 = vmatmul.mubr.f32.gmra.mxu0 %v79
    %v192 = vpop.f32.mrf.mxu0
    %v193 = vadd.f32 %v75, %v192
    %v194 = vpop.f32.mrf.mxu0
    %195 = vmatprep.mubr.f32.mxu0 0.0
    %196 = vmatmul.mubr.f32.gmra.mxu0 %v82
    %v197 = vpop.f32.mrf.mxu0
    %v198 = vadd.f32 %v75, %v197
    %v199 = vpop.f32.mrf.mxu0
    %200 = vmatprep.mubr.f32.mxu0 0.0
    %201 = vmatmul.mubr.f32.gmra.mxu0 %v85
    %v202 = vpop.f32.mrf.mxu0
    %v203 = vadd.f32 %v75, %v202
    %v204 = vpop.f32.mrf.mxu0
    %205 = vmatprep.mubr.f32.mxu0 0.0
    %206 = vmatmul.mubr.f32.gmra.mxu0 %v88
    %v207 = vpop.f32.mrf.mxu0
    %v208 = vadd.f32 %v75, %v207
    %v209 = vpop.f32.mrf.mxu0
    %210 = vmatprep.mubr.f32.mxu0 0.0
    %211 = vmatmul.mubr.f32.gmra.mxu0 %v91
    %v212 = vpop.f32.mrf.mxu0
    %v213 = vadd.f32 %v75, %v212
    %v214 = vpop.f32.mrf.mxu0
    %215 = vmatprep.mubr.f32.mxu0 0.0
    %216 = vmatmul.mubr.f32.gmra.mxu0 %v94
    %v217 = vpop.f32.mrf.mxu0
    %v218 = vadd.f32 %v75, %v217
    %v219 = vpop.f32.mrf.mxu0
    %220 = vmatprep.mubr.f32.mxu0 0.0
    %221 = vmatmul.mubr.f32.gmra.mxu0 %v97
    %v222 = vpop.f32.mrf.mxu0
    %v223 = vadd.f32 %v75, %v222
    %v224 = vpop.f32.mrf.mxu0
    %225 = vmatprep.mubr.f32.mxu0 0.0
    %226 = vmatmul.mubr.f32.gmra.mxu0 %v100
    %v227 = vpop.f32.mrf.mxu0
    %v228 = vadd.f32 %v75, %v227
    %v229 = vpop.f32.mrf.mxu0
    %230 = vmatprep.mubr.f32.mxu0 0.0
    %231 = vmatmul.mubr.f32.gmra.mxu0 %v103
    %v232 = vpop.f32.mrf.mxu0
    %v233 = vadd.f32 %v75, %v232
    %v234 = vpop.f32.mrf.mxu0
    %235 = vmatprep.mubr.f32.mxu0 0.0
    %236 = vmatmul.mubr.f32.gmra.mxu0 %v106
    %v237 = vpop.f32.mrf.mxu0
    %v238 = vadd.f32 %v75, %v237
    %v239 = vpop.f32.mrf.mxu0
    %240 = vmatprep.mubr.f32.mxu0 0.0
    %241 = vmatmul.mubr.f32.gmra.mxu0 %v109
    %v242 = vpop.f32.mrf.mxu0
    %v243 = vadd.f32 %v75, %v242
    %v244 = vpop.f32.mrf.mxu0
    %245 = vmatprep.mubr.f32.mxu0 0.0
    %246 = vmatmul.mubr.f32.gmra.mxu0 %v112
    %v247 = vpop.f32.mrf.mxu0
    %v248 = vadd.f32 %v75, %v247
    %v249 = vpop.f32.mrf.mxu0
    %250 = vmatprep.mubr.f32.mxu0 0.0
    %251 = vmatmul.mubr.f32.gmra.mxu0 %v115
    %v252 = vpop.f32.mrf.mxu0
    %v253 = vadd.f32 %v75, %v252
    %v254 = vpop.f32.mrf.mxu0
    %255 = vmatprep.mubr.f32.mxu0 0.0
    %256 = vmatmul.mubr.f32.gmra.mxu0 %v118
    %v257 = vpop.f32.mrf.mxu0
    %v258 = vadd.f32 %v75, %v257
    %v259 = vpop.f32.mrf.mxu0
    %260 = vmatprep.mubr.f32.mxu0 0.0
    %261 = vmatmul.mubr.f32.gmra.mxu0 %v121
    %v262 = vpop.f32.mrf.mxu0
    %v263 = vadd.f32 %v75, %v262
    %v264 = vpop.f32.mrf.mxu0
    %265 = vmatprep.mubr.f32.mxu0 0.0
    %266 = vmatmul.mubr.f32.gmra.mxu0 %v124
    %v267 = vpop.f32.mrf.mxu0
    %v268 = vadd.f32 %v75, %v267
    %v269 = vpop.f32.mrf.mxu0
    %270 = vdwg.mxu0
    %v271 = vmax.f32 %v193, 0.0
    %v272 = vmax.f32 %v198, 0.0
    %v273 = vmax.f32 %v203, 0.0
    %v274 = vmax.f32 %v208, 0.0
    %v275 = vmax.f32 %v213, 0.0
    %v276 = vmax.f32 %v218, 0.0
    %v277 = vmax.f32 %v223, 0.0
    %v278 = vmax.f32 %v228, 0.0
    %v279 = vmax.f32 %v233, 0.0
    %v280 = vmax.f32 %v238, 0.0
    %v281 = vmax.f32 %v243, 0.0
    %v282 = vmax.f32 %v248, 0.0
    %v283 = vmax.f32 %v253, 0.0
    %v284 = vmax.f32 %v258, 0.0
    %v285 = vmax.f32 %v263, 0.0
    %v286 = vmax.f32 %v268, 0.0
    %v287 = vld [vmem:[%s3] sm:$0x1]
    %s288 = sld [smem:[#allocation2]]
    %v289 = vstv %s288
    %v291 = vsel %vm77, %v287, 0
    %v294 = vsel %vm77, %v271, 0
    %v297 = vsel %vm77, %v272, 0
    %v300 = vsel %vm77, %v273, 0
    %v303 = vsel %vm77, %v274, 0
    %v306 = vsel %vm77, %v275, 0
    %v309 = vsel %vm77, %v276, 0
    %v312 = vsel %vm77, %v277, 0
    %v315 = vsel %vm77, %v278, 0
    %v318 = vsel %vm77, %v279, 0
    %v321 = vsel %vm77, %v280, 0
    %v324 = vsel %vm77, %v281, 0
    %v327 = vsel %vm77, %v282, 0
    %v330 = vsel %vm77, %v283, 0
    %v333 = vsel %vm77, %v284, 0
    %v336 = vsel %vm77, %v285, 0
    %v339 = vsel %vm77, %v286, 0
    %341 = vmatprep.subr.mxu0 0.0
    %342 = vmatpush1.xpose.msra.mxu0 %v339
    %343 = vmatprep.subr.mxu0 0.0
    %344 = vmatpush1.xpose.msra.mxu0 %v336
    %345 = vmatprep.subr.mxu0 0.0
    %346 = vmatpush1.xpose.msra.mxu0 %v333
    %347 = vmatprep.subr.mxu0 0.0
    %348 = vmatpush1.xpose.msra.mxu0 %v330
    %349 = vmatprep.subr.mxu0 0.0
    %350 = vmatpush1.xpose.msra.mxu0 %v327
    %351 = vmatprep.subr.mxu0 0.0
    %352 = vmatpush1.xpose.msra.mxu0 %v324
    %353 = vmatprep.subr.mxu0 0.0
    %354 = vmatpush1.xpose.msra.mxu0 %v321
    %355 = vmatprep.subr.mxu0 0.0
    %356 = vmatpush1.xpose.msra.mxu0 %v318
    %357 = vmatprep.subr.mxu0 0.0
    %358 = vmatpush1.xpose.msra.mxu0 %v315
    %359 = vmatprep.subr.mxu0 0.0
    %360 = vmatpush1.xpose.msra.mxu0 %v312
    %361 = vmatprep.subr.mxu0 0.0
    %362 = vmatpush1.xpose.msra.mxu0 %v309
    %363 = vmatprep.subr.mxu0 0.0
    %364 = vmatpush1.xpose.msra.mxu0 %v306
    %365 = vmatprep.subr.mxu0 0.0
    %366 = vmatpush1.xpose.msra.mxu0 %v303
    %367 = vmatprep.subr.mxu0 0.0
    %368 = vmatpush1.xpose.msra.mxu0 %v300
    %369 = vmatprep.subr.mxu0 0.0
    %370 = vmatpush1.xpose.msra.mxu0 %v297
    %371 = vmatprep.subr.mxu0 0.0
    %372 = vmatpush1.xpose.msra.mxu0 %v294
    %373 = vmatprep.subr.mxu0 0.0
    %374 = vmatpush2.xpose.msra.mxu0 0.0
    %375 = vmatprep.subr.mxu0 0.0
    %376 = vmatpush2.xpose.msra.mxu0 0.0
    %377 = vmatprep.subr.mxu0 0.0
    %378 = vmatpush2.xpose.msra.mxu0 0.0
    %379 = vmatprep.subr.mxu0 0.0
    %380 = vmatpush2.xpose.msra.mxu0 0.0
    %381 = vmatprep.subr.mxu0 0.0
    %382 = vmatpush2.xpose.msra.mxu0 0.0
    %383 = vmatprep.subr.mxu0 0.0
    %384 = vmatpush2.xpose.msra.mxu0 0.0
    %385 = vmatprep.subr.mxu0 0.0
    %386 = vmatpush2.xpose.msra.mxu0 0.0
    %387 = vmatprep.subr.mxu0 0.0
    %388 = vmatpush2.xpose.msra.mxu0 0.0
    %389 = vmatprep.subr.mxu0 0.0
    %390 = vmatpush2.xpose.msra.mxu0 0.0
    %391 = vmatprep.subr.mxu0 0.0
    %392 = vmatpush2.xpose.msra.mxu0 0.0
    %393 = vmatprep.subr.mxu0 0.0
    %394 = vmatpush2.xpose.msra.mxu0 0.0
    %395 = vmatprep.subr.mxu0 0.0
    %396 = vmatpush2.xpose.msra.mxu0 0.0
    %397 = vmatprep.subr.mxu0 0.0
    %398 = vmatpush2.xpose.msra.mxu0 0.0
    %399 = vmatprep.subr.mxu0 0.0
    %400 = vmatpush2.xpose.msra.mxu0 0.0
    %401 = vmatprep.subr.mxu0 0.0
    %402 = vmatpush2.xpose.msra.mxu0 0.0
    %403 = vmatprep.subr.mxu0 0.0
    %404 = vmatpush2.xpose.msra.mxu0 0.0
    %405 = vmatprep.mubr.f32.mxu0 0.0
    %406 = vmatmul.mubr.f32.gmra.mxu0 %v291
    %v407 = vpop.f32.mrf.mxu0
    %v408 = vadd.f32 %v289, %v407
    %v409 = vpop.f32.mrf.mxu0
    %410 = vdwg.mxu0
    %411 = vst [vmem:[#allocation8] sm:$0x1] %v408
    // Predicated region
    $region30: #{tpu_custom_call.1} parent=1 // pred_check
      _
    $region31: #{tpu_custom_call.1} parent=1 // pred_check_branch
      %413 = sbr.rel (0) target = $region33
    $region32: #{tpu_custom_call.1} parent=1 // pred_region
      %s415 = ssub.s32 16, 16
      %416 = vsyncadd [#allocation5], %s415
      %s418 = sshll.u32 [#allocation8], 4
      %s419 = int_to_ptr.vmem [resolvable:$true] %s418
      %421 = dma.vmem_to_hbm [thread:$0]  %s419, 16, %s5, [#allocation5]
    $region33: #{tpu_custom_call.1} parent=1 // pred_fallthru
      _
    // Predicated region
    $region34: #{tpu_custom_call.1} parent=1 // pred_check
      _
    $region35: #{tpu_custom_call.1} parent=1 // pred_check_branch
      %423 = sbr.rel (0) target = $region37
    $region36: #{tpu_custom_call.1} parent=1 // pred_region
      %424 = dma.done [#allocation5], 16
    $region37: #{tpu_custom_call.1} parent=1 // pred_fallthru
      _
    %425 = vsyncpa [#allocation4], 1
    %426 = vsyncpa [#allocation7], 1
    %427 = vsyncpa [#allocation5], 1

</llo_original>
